<compile_context>
chip_gen: v5e
topology: v5e:2x2
jax: 0.10.0
libtpu: 0.0.40
codegen_flags: <defaults>
</compile_context>

<pallas_src>
import functools

import jax
import jax.numpy as jnp
from jax.experimental import pallas as pl
from jax.experimental.pallas import tpu as pltpu


def _label_smoothing_kernel(tgt_ref, x_ref, out_ref, *, smoothing, classes):
    # tgt_ref: (TN, 1) int32 labels
    # x_ref:   (TN, C) logits (any float dtype; math done in f32)
    # out_ref: (TN, 1) f32 per-row loss
    x = x_ref[...].astype(jnp.float32)                            # (TN, C)

    # Numerically-stable pieces of log-softmax; reductions only, no full lsm.
    m = jnp.max(x, axis=-1, keepdims=True)                        # (TN, 1)  XLU
    shifted = x - m                                               # (TN, C)  VPU
    sum_exp = jnp.sum(jnp.exp(shifted), axis=-1, keepdims=True)   # EUP + XLU
    lse = jnp.log(sum_exp)                                        # (TN, 1)  EUP
    sum_shifted = jnp.sum(shifted, axis=-1, keepdims=True)        # (TN, 1)  XLU

    # shifted at the target class: masked lane reduction (no one-hot tensor).
    tgt = tgt_ref[...]                                            # (TN, 1) int32
    col = jax.lax.broadcasted_iota(jnp.int32, shifted.shape, 1)
    shifted_tgt = jnp.sum(
        jnp.where(col == tgt, shifted, 0.0), axis=-1, keepdims=True
    )                                                             # (TN, 1)

    # smooth[c] = off + (on - off) * 1[c == tgt]
    #   sum_c smooth[c] * lsm[c]
    #     = off * (sum_shifted - C * lse) + (on - off) * (shifted_tgt - lse)
    off = smoothing / (classes - 1) if classes > 1 else 0.0
    on = 1.0 - smoothing
    dot = off * (sum_shifted - float(classes) * lse) + (on - off) * (
        shifted_tgt - lse
    )
    out_ref[...] = -dot                                           # (TN, 1)


def _choose_block_rows(n, c, itemsize):
    # Target ~4 MiB of f32 working tile per grid step:
    #   * big enough that per-step DMA (>= ~3 us on v6e) hides the ~0.35 us
    #     per-step pipeline overhead,
    #   * small enough that 2x input buffers + elementwise f32 temporaries stay
    #     well inside v7x's 64 MiB VMEM.
    del itemsize  # budget is expressed in f32-working-set terms
    f32_row_bytes = max(c, 1) * 4
    budget = 4 * 1024 * 1024
    tn = max(8, budget // f32_row_bytes)
    tn = min(tn, 4096)                       # keep reduction trees / vregs sane
    tn = (tn // 8) * 8                       # sublane multiple
    if tn >= n:
        return n                             # single tile spanning the full batch
    return max(8, tn)


def _vmem_limit_bytes(tn, c, itemsize):
    # Double-buffered input tile + generous allowance for f32 elementwise
    # temporaries + labels/output + slack; capped so the request is always
    # grantable on every generation (v7x physical VMEM is 64 MiB).
    in_tile = tn * c * itemsize
    f32_tile = tn * c * 4
    need = 2 * in_tile + 6 * f32_tile + (1 << 20)
    return int(min(max(need, 16 << 20), 48 << 20))


def label_smoothing_loss(logits, target, smoothing=0.0, *, block_rows=None):
    """logits: (N, C) float, target: (N,) int -> scalar f32 loss."""
    assert 0.0 <= smoothing < 1.0
    N, C = logits.shape
    itemsize = jnp.dtype(logits.dtype).itemsize
    tn = block_rows if block_rows is not None else _choose_block_rows(N, C, itemsize)
    num_tiles = pl.cdiv(N, tn)

    tgt2d = target.reshape(N, 1).astype(jnp.int32)

    kernel = functools.partial(
        _label_smoothing_kernel, smoothing=float(smoothing), classes=int(C)
    )

    per_row = pl.pallas_call(
        kernel,
        out_shape=jax.ShapeDtypeStruct((N, 1), jnp.float32),
        grid=(num_tiles,),
        in_specs=[
            pl.BlockSpec((tn, 1), lambda i: (i, 0)),   # labels tile
            pl.BlockSpec((tn, C), lambda i: (i, 0)),   # logits tile (C on lanes)
        ],
        out_specs=pl.BlockSpec((tn, 1), lambda i: (i, 0)),
        compiler_params=pltpu.CompilerParams(
            dimension_semantics=("parallel",),          # megacore-shardable
            vmem_limit_bytes=_vmem_limit_bytes(tn, C, itemsize),
        ),
    )(tgt2d, logits)

    # Tiny epilogue in plain JAX: mean over the true batch size (ragged pad
    # rows never reach HBM thanks to the clipped output writeback).
    return jnp.mean(per_row)

    # TODO(synk): for extremely large vocabularies (C so big a single (TN, C)
    # row-tile cannot double-buffer in VMEM), add a class-axis grid dim with an
    # online logsumexp; not needed at these shapes.


def _reference(logits, target, smoothing):
    N, C = logits.shape
    onehot = jax.nn.one_hot(target, C, dtype=jnp.float32)
    smooth = onehot * (1.0 - smoothing) + (1.0 - onehot) * (smoothing / (C - 1))
    lsm = jax.nn.log_softmax(logits.astype(jnp.float32), axis=-1)
    return jnp.mean(-jnp.sum(smooth * lsm, axis=-1))


if __name__ == "__main__":
    key = jax.random.PRNGKey(0)
    k1, k2, k3, k4 = jax.random.split(key, 4)

    smoothing = 0.1          # module __init__ hyperparameter (deterministic)

    # Main test: batch=8, classes=32.
    N, C = 8, 32
    logits = jax.random.normal(k1, (N, C), dtype=jnp.float32)
    target = jax.random.randint(k2, (N,), 0, C, dtype=jnp.int32)
    loss = jax.block_until_ready(label_smoothing_loss(logits, target, smoothing=smoothing))
    ref = _reference(logits, target, smoothing)
    assert jnp.allclose(loss, ref, atol=1e-5, rtol=1e-5), (loss, ref)

    # Ragged-tile test: batch not a multiple of the row tile (clipped writeback).
    N2 = 12
    logits2 = jax.random.normal(k3, (N2, C), dtype=jnp.float32)
    target2 = jax.random.randint(k4, (N2,), 0, C, dtype=jnp.int32)
    loss2 = jax.block_until_ready(
        label_smoothing_loss(logits2, target2, smoothing=smoothing, block_rows=8)
    )
    ref2 = _reference(logits2, target2, smoothing)
    assert jnp.allclose(loss2, ref2, atol=1e-5, rtol=1e-5), (loss2, ref2)

    print("KERNEL_OK")
</pallas_src>

<mosaic_0001>
module attributes {stable_mosaic.version = 11 : i64} {
  func.func @_label_smoothing_kernel(%arg0: i32, %arg1: memref<8x1xi32, #tpu.memory_space<vmem>>, %arg2: memref<8x32xf32, #tpu.memory_space<vmem>>, %arg3: memref<8x1xf32, #tpu.memory_space<vmem>>) attributes {dimension_semantics = [#tpu.dimension_semantics<parallel>], iteration_bounds = array<i64: 1>, scalar_prefetch = 0 : i64, scratch_operands = 0 : i64, tpu.core_type = #tpu.core_type<tc>, window_params = [{transform_indices = @transform_0, window_bounds = array<i64: 8, 1>}, {transform_indices = @transform_1, window_bounds = array<i64: 8, 32>}, {transform_indices = @transform_2, window_bounds = array<i64: 8, 1>}]} {
    %c0 = arith.constant 0 : index
    %c0_0 = arith.constant 0 : index
    %0 = vector.load %arg2[%c0, %c0_0] : memref<8x32xf32, #tpu.memory_space<vmem>>, vector<8x32xf32>
    %cst = arith.constant dense<0xFF800000> : vector<8xf32>
    %1 = vector.multi_reduction <maximumf>, %0, %cst [1] : vector<8x32xf32> to vector<8xf32>
    %2 = vector.shape_cast %1 : vector<8xf32> to vector<8x1xf32>
    %3 = vector.broadcast %2 : vector<8x1xf32> to vector<8x32xf32>
    %4 = arith.subf %0, %3 : vector<8x32xf32>
    %5 = math.exp %4 : vector<8x32xf32>
    %cst_1 = arith.constant dense<0.000000e+00> : vector<8xf32>
    %6 = vector.multi_reduction <add>, %5, %cst_1 [1] : vector<8x32xf32> to vector<8xf32>
    %7 = vector.shape_cast %6 : vector<8xf32> to vector<8x1xf32>
    %8 = math.log %7 : vector<8x1xf32>
    %cst_2 = arith.constant dense<0.000000e+00> : vector<8xf32>
    %9 = vector.multi_reduction <add>, %4, %cst_2 [1] : vector<8x32xf32> to vector<8xf32>
    %10 = vector.shape_cast %9 : vector<8xf32> to vector<8x1xf32>
    %c0_3 = arith.constant 0 : index
    %c0_4 = arith.constant 0 : index
    %11 = vector.load %arg1[%c0_3, %c0_4] : memref<8x1xi32, #tpu.memory_space<vmem>>, vector<8x1xi32>
    %12 = tpu.iota {dimensions = array<i32: 1>} : vector<8x32xi32>
    %13 = vector.broadcast %11 : vector<8x1xi32> to vector<8x32xi32>
    %14 = arith.cmpi eq, %12, %13 : vector<8x32xi32>
    %cst_5 = arith.constant 0.000000e+00 : f32
    %15 = vector.broadcast %cst_5 : f32 to vector<8x32xf32>
    %16 = arith.select %14, %4, %15 : vector<8x32xi1>, vector<8x32xf32>
    %cst_6 = arith.constant dense<0.000000e+00> : vector<8xf32>
    %17 = vector.multi_reduction <add>, %16, %cst_6 [1] : vector<8x32xf32> to vector<8xf32>
    %18 = vector.shape_cast %17 : vector<8xf32> to vector<8x1xf32>
    %cst_7 = arith.constant 3.200000e+01 : f32
    %19 = vector.broadcast %cst_7 : f32 to vector<8x1xf32>
    %20 = arith.mulf %19, %8 : vector<8x1xf32>
    %21 = arith.subf %10, %20 : vector<8x1xf32>
    %cst_8 = arith.constant 0.0032258064 : f32
    %22 = vector.broadcast %cst_8 : f32 to vector<8x1xf32>
    %23 = arith.mulf %22, %21 : vector<8x1xf32>
    %24 = arith.subf %18, %8 : vector<8x1xf32>
    %cst_9 = arith.constant 0.896774172 : f32
    %25 = vector.broadcast %cst_9 : f32 to vector<8x1xf32>
    %26 = arith.mulf %25, %24 : vector<8x1xf32>
    %27 = arith.addf %23, %26 : vector<8x1xf32>
    %cst_10 = arith.constant 0.000000e+00 : f32
    %28 = vector.broadcast %cst_10 : f32 to vector<8x1xf32>
    %29 = arith.subf %28, %27 : vector<8x1xf32>
    %c0_11 = arith.constant 0 : index
    %c0_12 = arith.constant 0 : index
    %30 = vector.load %arg3[%c0_11, %c0_12] : memref<8x1xf32, #tpu.memory_space<vmem>>, vector<8x1xf32>
    tpu.vector_store %arg3[%c0_11, %c0_12], %29 {strides = array<i32>} : memref<8x1xf32, #tpu.memory_space<vmem>>, vector<8x1xf32>,
    return
  }
  func.func @transform_0(%arg0: i32) -> (i32, i32) {
    %c0_i32 = arith.constant 0 : i32
    %c0_i32_0 = arith.constant 0 : i32
    return %arg0, %c0_i32 : i32, i32
  }
  func.func @transform_1(%arg0: i32) -> (i32, i32) {
    %c0_i32 = arith.constant 0 : i32
    %c0_i32_0 = arith.constant 0 : i32
    return %arg0, %c0_i32 : i32, i32
  }
  func.func @transform_2(%arg0: i32) -> (i32, i32) {
    %c0_i32 = arith.constant 0 : i32
    %c0_i32_0 = arith.constant 0 : i32
    return %arg0, %c0_i32 : i32, i32
  }
}

</mosaic_0001>

<llo_original>
// kernel: tpu_custom_call.1
$region0: #{tpu_custom_call.1}
  #allocation0 [shape = 'u32[]', space=smem, size = 0x4, offset = 0x4, fixed_abs, tag = 'smem constant byte address 0x4 - core index']
  #allocation1 [shape = 'u32[72,128]{1,0:T(1,128)}', space=vmem, size = 0x9000, scoped, tag = 'internal scratch']
  %s0 = inlined_call_operand.vmem [shape: s32[8,1], index: 0, kind: input, shape index: {}]
  %s1 = inlined_call_operand.vmem [shape: f32[8,32], index: 1, kind: input, shape index: {}]
  %s2 = inlined_call_operand.vmem [shape: f32[8,1], index: 2, kind: output, shape index: {}]
  %s3 = sld [smem:[#allocation0]]
  $region18: #{tpu_custom_call.1} parent=0
    _
  %s5 = ssub.s32 1, %s3
  %s6 = scalar_select 0, %s5, %s3
  // Predicated region
  $region2: #{tpu_custom_call.1} parent=0 // pred_check
    _
  $region3: #{tpu_custom_call.1} parent=0 // pred_check_branch
    %8 = sbr.rel (0) target = $region5
  $region4: #{tpu_custom_call.1} parent=0 // pred_region
    _
  $region5: #{tpu_custom_call.1} parent=0 // pred_fallthru
    _
  // Predicated region
  $region6: #{tpu_custom_call.1} parent=0 // pred_check
    _
  $region7: #{tpu_custom_call.1} parent=0 // pred_check_branch
    %10 = sbr.rel (0) target = $region9
  $region8: #{tpu_custom_call.1} parent=0 // pred_region
    _
  $region9: #{tpu_custom_call.1} parent=0 // pred_fallthru
    _
  %v11 = vld [vmem:[%s1] sm:$0xff]
  %vm12 = vcmask 261120
  %v13 = vsel %vm12, %v11, -inf
  %14 = vmax.xlane.f32.xlu0 %v13
  %v15 = vpop.xlane.xlu0 %14
  %v16 = vsub.f32 %v11, %v15
  %v17 = vmul.f32 %v16, 1.442695
  %v18 = vpow.pop %v17
  %v19 = vsel %vm12, %v18, 0.0
  %20 = vadd.xlane.f32.xlu0 %v19
  %v21 = vpop.xlane.xlu0 %20
  %v22 = vlog2.pop %v21
  %v23 = vmul.f32 %v22, 0.6931472
  %v24 = vsel %vm12, %v16, 0.0
  %25 = vadd.xlane.f32.xlu0 %v24
  %v26 = vpop.xlane.xlu0 %25
  %v27 = vld [vmem:[%s0] sm:$0xff]
  %v28 = vlaneseq
  %v29 = vand.u32 %v28, 127
  %30 = vset.pattern.permute.xlu0 0
  %31 = vperm.xlu0 %30, %v27
  %v32 = vpop.permute.xlu0 %31
  %vm33 = vcmp.eq.s32.totalorder %v29, %v32
  %v34 = vsel %vm33, %v16, 0.0
  %v35 = vsel %vm12, %v34, 0.0
  %36 = vadd.xlane.f32.xlu0 %v35
  %v37 = vpop.xlane.xlu0 %36
  %v38 = vmul.f32 %v23, 32.0
  %v39 = vsub.f32 %v26, %v38
  %v40 = vmul.f32 %v39, 0.0032258064
  %v41 = vsub.f32 %v37, %v23
  %v42 = vmul.f32 %v41, 0.8967742
  %v43 = vadd.f32 %v40, %v42
  %v44 = vsub.f32 0.0, %v43
  %vm45 = vcmask 7168
  %46 = vst.msk [vmem:[%s2] sm:$0xff] %vm45, %v44
  // Predicated region
  $region10: #{tpu_custom_call.1} parent=0 // pred_check
    _
  $region11: #{tpu_custom_call.1} parent=0 // pred_check_branch
    %48 = sbr.rel (0) target = $region13
  $region12: #{tpu_custom_call.1} parent=0 // pred_region
    _
  $region13: #{tpu_custom_call.1} parent=0 // pred_fallthru
    _
  // Predicated region
  $region14: #{tpu_custom_call.1} parent=0 // pred_check
    _
  $region15: #{tpu_custom_call.1} parent=0 // pred_check_branch
    %50 = sbr.rel (0) target = $region17
  $region16: #{tpu_custom_call.1} parent=0 // pred_region
    _
  $region17: #{tpu_custom_call.1} parent=0 // pred_fallthru
    _

</llo_original>
